<compile_context>
chip_gen: v7x
topology: tpu7x:2x2x1
jax: 0.10.0
libtpu: 0.0.40
codegen_flags: <defaults>
</compile_context>

<pallas_src>
import functools

import jax
import jax.numpy as jnp
from jax.experimental import pallas as pl
from jax.experimental.pallas import tpu as pltpu


def _mlp_aux_kernel(x_ref, w1_ref, w2_ref, w3_ref, bias_ref, ab_ref, c_ref, *, Bp):
    # Bias slab: row 0 = b1 [128], row 1 = b2 (zero-padded to 128),
    #            row 2 = extended fc3 bias (cols 0:10 = b3,
    #                    col 10 = b3@w4a + b4, col 11 = b3@w4b).
    b1 = bias_ref[0:1, :]
    b2 = bias_ref[1:2, :]
    b3 = bias_ref[2:3, :]

    x = x_ref[...]                                            # [2Bp, 196]

    h = jnp.dot(x, w1_ref[...], preferred_element_type=jnp.float32) + b1
    h = jnp.maximum(h, 0.0)
    # dropout(0.15) -> identity in eval mode
    h = jnp.dot(h, w2_ref[...], preferred_element_type=jnp.float32) + b2
    h = jnp.maximum(h, 0.0)                                   # pad cols stay 0
    h = jnp.dot(h, w3_ref[...], preferred_element_type=jnp.float32) + b3
    # h: [2Bp, 128]; cols 0:10 hold fc3 output, cols 10/11 hold fused fc4
    # partial sums, cols 12:128 are zero.
    ab_ref[...] = h                                           # lane-dense store

    # fc4 was folded into fc3: logit = (a@w4a + b4) + (b@w4b)
    logit = h[:Bp, 10:11] + h[Bp:, 11:12]                     # [Bp, 1]
    c_ref[...] = 1.0 / (1.0 + jnp.exp(-logit))                # sigmoid (exp on EUP)


def pack_params(params):
    """Pack raw params (w[in,out], b[1,out]) into lane-dense kernel slabs."""
    w1, b1, w2, b2, w3, b3, w4, b4 = params

    w4a = w4[:10, 0]                       # fc4 rows that multiply `a`
    w4b = w4[10:, 0]                       # fc4 rows that multiply `b`

    w2p = jnp.zeros((128, 128), jnp.float32).at[:, :84].set(w2)

    # Extended fc3 weight: cols 0:10 = w3, col 10 = w3@w4a, col 11 = w3@w4b.
    w3p = jnp.zeros((128, 128), jnp.float32)
    w3p = w3p.at[:84, :10].set(w3)
    w3p = w3p.at[:84, 10].set(w3 @ w4a)
    w3p = w3p.at[:84, 11].set(w3 @ w4b)

    bias = jnp.zeros((3, 128), jnp.float32)
    bias = bias.at[0, :128].set(b1[0])
    bias = bias.at[1, :84].set(b2[0])
    bias = bias.at[2, :10].set(b3[0])
    bias = bias.at[2, 10].set(jnp.dot(b3[0], w4a) + b4[0, 0])
    bias = bias.at[2, 11].set(jnp.dot(b3[0], w4b))

    return (w1, w2p, w3p, bias)


def mlp_aux_forward(x, packed_params):
    """x: [B, 2, 14, 14] float32 (NCHW).  Returns (c_squeezed, a, b)."""
    B = x.shape[0]
    Bp = max(8, ((B + 7) // 8) * 8)          # pad batch to a sublane multiple

    # Stack the two channel branches along the batch (sublane) axis:
    # rows [0:Bp) = channel 0 ("a"), rows [Bp:2Bp) = channel 1 ("b").
    xs = x.transpose(1, 0, 2, 3).reshape(2, B, 196)
    if Bp != B:
        xs = jnp.pad(xs, ((0, 0), (0, Bp - B), (0, 0)))
    xs = xs.reshape(2 * Bp, 196)

    w1, w2p, w3p, bias = packed_params

    vmem = pl.BlockSpec(memory_space=pltpu.MemorySpace.VMEM)

    out_ab, out_c = pl.pallas_call(
        functools.partial(_mlp_aux_kernel, Bp=Bp),
        out_shape=(
            jax.ShapeDtypeStruct((2 * Bp, 128), jnp.float32),  # stacked fc3 out
            jax.ShapeDtypeStruct((Bp, 1), jnp.float32),        # sigmoid(fc4)
        ),
        in_specs=[vmem] * 5,
        out_specs=(vmem, vmem),
    )(xs, w1, w2p, w3p, bias)

    a = out_ab[:B, :10]
    b = out_ab[Bp:Bp + B, :10]
    # Match torch's c.squeeze(): (B,) for B > 1, 0-d for B == 1.
    c = jnp.squeeze(out_c[:B])
    return c, a, b


def init_params(key):
    """Deterministic synthetic parameters with nn.Linear shapes.

    Weights are stored as [in_features, out_features] (transposed vs PyTorch),
    biases as [1, out_features].
    """
    ks = jax.random.split(key, 8)

    def linear(kw, kb, fan_in, fan_out):
        bound = 1.0 / jnp.sqrt(fan_in)
        w = jax.random.uniform(kw, (fan_in, fan_out), jnp.float32, -bound, bound)
        b = jax.random.uniform(kb, (1, fan_out), jnp.float32, -bound, bound)
        return w, b

    w1, b1 = linear(ks[0], ks[1], 196, 128)
    w2, b2 = linear(ks[2], ks[3], 128, 84)
    w3, b3 = linear(ks[4], ks[5], 84, 10)
    w4, b4 = linear(ks[6], ks[7], 20, 1)
    return (w1, b1, w2, b2, w3, b3, w4, b4)


def _reference_forward(x, params):
    """Pure-JAX reference for correctness check (mirrors the PyTorch module)."""
    w1, b1, w2, b2, w3, b3, w4, b4 = params
    B = x.shape[0]

    def branch(z):
        h = jnp.maximum(z @ w1 + b1, 0.0)
        h = jnp.maximum(h @ w2 + b2, 0.0)
        return h @ w3 + b3

    a = branch(x[:, 0, :, :].reshape(B, 196))
    b = branch(x[:, 1, :, :].reshape(B, 196))
    c = jax.nn.sigmoid(jnp.concatenate([a, b], axis=1) @ w4 + b4)
    return jnp.squeeze(c), a, b


if __name__ == "__main__":
    key = jax.random.PRNGKey(0)
    kx, kp = jax.random.split(key)

    B = 8
    x = jax.random.normal(kx, (B, 2, 14, 14), dtype=jnp.float32)
    params = init_params(kp)
    packed = pack_params(params)

    c, a, b = mlp_aux_forward(x, packed)
    jax.block_until_ready((c, a, b))

    c_ref, a_ref, b_ref = _reference_forward(x, params)
    assert c.shape == (B,) and a.shape == (B, 10) and b.shape == (B, 10)
    assert jnp.allclose(c, c_ref, atol=1e-5, rtol=1e-5)
    assert jnp.allclose(a, a_ref, atol=1e-4, rtol=1e-4)
    assert jnp.allclose(b, b_ref, atol=1e-4, rtol=1e-4)

    print("KERNEL_OK")
</pallas_src>

<mosaic_0001>
module attributes {stable_mosaic.version = 11 : i64} {
  func.func @_mlp_aux_kernel(%arg0: memref<16x196xf32, #tpu.memory_space<vmem>>, %arg1: memref<196x128xf32, #tpu.memory_space<vmem>>, %arg2: memref<128x128xf32, #tpu.memory_space<vmem>>, %arg3: memref<128x128xf32, #tpu.memory_space<vmem>>, %arg4: memref<3x128xf32, #tpu.memory_space<vmem>>, %arg5: memref<16x128xf32, #tpu.memory_space<vmem>>, %arg6: memref<8x1xf32, #tpu.memory_space<vmem>>) attributes {dimension_semantics = [], scalar_prefetch = 0 : i64, scratch_operands = 0 : i64, tpu.core_type = #tpu.core_type<tc>} {
    %c0 = arith.constant 0 : index
    %c0_0 = arith.constant 0 : index
    %0 = vector.load %arg4[%c0, %c0_0] : memref<3x128xf32, #tpu.memory_space<vmem>>, vector<1x128xf32>
    %c1 = arith.constant 1 : index
    %c0_1 = arith.constant 0 : index
    %1 = vector.load %arg4[%c1, %c0_1] : memref<3x128xf32, #tpu.memory_space<vmem>>, vector<1x128xf32>
    %c2 = arith.constant 2 : index
    %c0_2 = arith.constant 0 : index
    %2 = vector.load %arg4[%c2, %c0_2] : memref<3x128xf32, #tpu.memory_space<vmem>>, vector<1x128xf32>
    %c0_3 = arith.constant 0 : index
    %c0_4 = arith.constant 0 : index
    %3 = vector.load %arg0[%c0_3, %c0_4] : memref<16x196xf32, #tpu.memory_space<vmem>>, vector<16x196xf32>
    %c0_5 = arith.constant 0 : index
    %c0_6 = arith.constant 0 : index
    %4 = vector.load %arg1[%c0_5, %c0_6] : memref<196x128xf32, #tpu.memory_space<vmem>>, vector<196x128xf32>
    %cst = arith.constant dense<0.000000e+00> : vector<16x128xf32>
    %5 = tpu.matmul %3, %4, %cst {dimension_numbers = #tpu.dot_dimension_numbers<[1], [0], [0], [1], [0, 0, 1, 1], [], []>} : vector<16x196xf32>, vector<196x128xf32>, vector<16x128xf32> -> vector<16x128xf32>
    %6 = vector.broadcast %0 : vector<1x128xf32> to vector<16x128xf32>
    %7 = arith.addf %5, %6 : vector<16x128xf32>
    %cst_7 = arith.constant 0.000000e+00 : f32
    %8 = vector.broadcast %cst_7 : f32 to vector<16x128xf32>
    %9 = arith.maximumf %7, %8 : vector<16x128xf32>
    %c0_8 = arith.constant 0 : index
    %c0_9 = arith.constant 0 : index
    %10 = vector.load %arg2[%c0_8, %c0_9] : memref<128x128xf32, #tpu.memory_space<vmem>>, vector<128x128xf32>
    %cst_10 = arith.constant dense<0.000000e+00> : vector<16x128xf32>
    %11 = tpu.matmul %9, %10, %cst_10 {dimension_numbers = #tpu.dot_dimension_numbers<[1], [0], [0], [1], [0, 0, 1, 1], [], []>} : vector<16x128xf32>, vector<128x128xf32>, vector<16x128xf32> -> vector<16x128xf32>
    %12 = vector.broadcast %1 : vector<1x128xf32> to vector<16x128xf32>
    %13 = arith.addf %11, %12 : vector<16x128xf32>
    %cst_11 = arith.constant 0.000000e+00 : f32
    %14 = vector.broadcast %cst_11 : f32 to vector<16x128xf32>
    %15 = arith.maximumf %13, %14 : vector<16x128xf32>
    %c0_12 = arith.constant 0 : index
    %c0_13 = arith.constant 0 : index
    %16 = vector.load %arg3[%c0_12, %c0_13] : memref<128x128xf32, #tpu.memory_space<vmem>>, vector<128x128xf32>
    %cst_14 = arith.constant dense<0.000000e+00> : vector<16x128xf32>
    %17 = tpu.matmul %15, %16, %cst_14 {dimension_numbers = #tpu.dot_dimension_numbers<[1], [0], [0], [1], [0, 0, 1, 1], [], []>} : vector<16x128xf32>, vector<128x128xf32>, vector<16x128xf32> -> vector<16x128xf32>
    %18 = vector.broadcast %2 : vector<1x128xf32> to vector<16x128xf32>
    %19 = arith.addf %17, %18 : vector<16x128xf32>
    %c0_15 = arith.constant 0 : index
    %c0_16 = arith.constant 0 : index
    %20 = vector.load %arg5[%c0_15, %c0_16] : memref<16x128xf32, #tpu.memory_space<vmem>>, vector<16x128xf32>
    tpu.vector_store %arg5[%c0_15, %c0_16], %19 {strides = array<i32>} : memref<16x128xf32, #tpu.memory_space<vmem>>, vector<16x128xf32>,
    %21 = vector.extract_strided_slice %19 {offsets = [0, 10], sizes = [8, 1], strides = [1, 1]} : vector<16x128xf32> to vector<8x1xf32>
    %22 = vector.extract_strided_slice %19 {offsets = [8, 11], sizes = [8, 1], strides = [1, 1]} : vector<16x128xf32> to vector<8x1xf32>
    %23 = arith.addf %21, %22 : vector<8x1xf32>
    %cst_17 = arith.constant 0.000000e+00 : f32
    %24 = vector.broadcast %cst_17 : f32 to vector<8x1xf32>
    %25 = arith.subf %24, %23 : vector<8x1xf32>
    %26 = math.exp %25 : vector<8x1xf32>
    %cst_18 = arith.constant 1.000000e+00 : f32
    %27 = vector.broadcast %cst_18 : f32 to vector<8x1xf32>
    %28 = arith.addf %27, %26 : vector<8x1xf32>
    %cst_19 = arith.constant 1.000000e+00 : f32
    %29 = vector.broadcast %cst_19 : f32 to vector<8x1xf32>
    %30 = arith.divf %29, %28 : vector<8x1xf32>
    %c0_20 = arith.constant 0 : index
    %c0_21 = arith.constant 0 : index
    %31 = vector.load %arg6[%c0_20, %c0_21] : memref<8x1xf32, #tpu.memory_space<vmem>>, vector<8x1xf32>
    tpu.vector_store %arg6[%c0_20, %c0_21], %30 {strides = array<i32>} : memref<8x1xf32, #tpu.memory_space<vmem>>, vector<8x1xf32>,
    return
  }
}

</mosaic_0001>

<llo_original>
// kernel: tpu_custom_call.1
$region0: #{tpu_custom_call.1}
  #allocation0 [shape = 'u32[]', space=smem, size = 0x4, offset = 0x4, fixed_abs, tag = 'smem constant byte address 0x4 - core index']
  #allocation1 [shape = 'u32[144,128]{1,0:T(1,128)}', space=vmem, size = 0x12000, scoped, tag = 'internal scratch']
  %s0 = inlined_call_operand.hbm [shape: f32[16,196], index: 0, kind: input, shape index: {}]
  %s1 = inlined_call_operand.hbm [shape: f32[196,128], index: 1, kind: input, shape index: {}]
  %s2 = inlined_call_operand.hbm [shape: f32[128,128], index: 2, kind: input, shape index: {}]
  %s3 = inlined_call_operand.hbm [shape: f32[128,128], index: 3, kind: input, shape index: {}]
  %s4 = inlined_call_operand.vmem [shape: f32[3,128], index: 4, kind: input, shape index: {}]
  %s5 = inlined_call_operand.hbm [shape: f32[16,128], index: 5, kind: output, shape index: {0}]
  %s6 = inlined_call_operand.vmem [shape: f32[8,1], index: 6, kind: output, shape index: {1}]
  %7 = xla_tuple %s5, %s6
  %s8 = sld [smem:[#allocation0]]
  $region54: #{tpu_custom_call.1} parent=0
    _
  %s10 = ssub.s32 1, %s8
  %s11 = scalar_select 0, %s10, %s8
  $region1: #{tpu_custom_call.1} parent=0
    #allocation2 [shape = 'u8[16384]{0}', space=vmem, size = 0x4000, scoped, tag = 'input window, operand 0, single buffered']
    #allocation3 [shape = 's32[1]{0}', space=sflag, size = 0x4, scoped, tag = 'scoped memory for tpu_custom_call.1']
    #allocation4 [shape = 's32[1]{0}', space=sflag, size = 0x4, scoped, tag = 'scoped memory for tpu_custom_call.1']
    #allocation5 [shape = 'u8[102400]{0}', space=vmem, size = 0x19000, scoped, tag = 'input window, operand 1, single buffered']
    #allocation6 [shape = 's32[1]{0}', space=sflag, size = 0x4, scoped, tag = 'scoped memory for tpu_custom_call.1']
    #allocation7 [shape = 'u8[65536]{0}', space=vmem, size = 0x10000, scoped, tag = 'input window, operand 2, single buffered']
    #allocation8 [shape = 'u8[65536]{0}', space=vmem, size = 0x10000, scoped, tag = 'input window, operand 3, single buffered']
    #allocation9 [shape = 's32[1]{0}', space=sflag, size = 0x4, scoped, tag = 'scoped memory for tpu_custom_call.1']
    #allocation10 [shape = 'u8[8192]{0}', space=vmem, size = 0x2000, scoped, tag = 'output window, operand 0, single buffered']
    %12 = vsyncpa [#allocation3], 0
    %13 = vsyncpa [#allocation6], 0
    %14 = vsyncpa [#allocation9], 0
    %15 = vsyncpa [#allocation4], 0
    // Predicated region
    $region2: #{tpu_custom_call.1} parent=1 // pred_check
      _
    $region3: #{tpu_custom_call.1} parent=1 // pred_check_branch
      %17 = sbr.rel (0) target = $region5
    $region4: #{tpu_custom_call.1} parent=1 // pred_region
      %s19 = ssub.s32 512, 512
      %20 = vsyncadd [#allocation3], %s19
      %s21 = sshll.u32 [#allocation2], 4
      %s22 = int_to_ptr.vmem [resolvable:$true] %s21
      %27 = dma.hbm_to_vmem [thread:$0]  %s0, 512, %s22, [#allocation3], 256, 256, 16
    $region5: #{tpu_custom_call.1} parent=1 // pred_fallthru
      _
    // Predicated region
    $region6: #{tpu_custom_call.1} parent=1 // pred_check
      _
    $region7: #{tpu_custom_call.1} parent=1 // pred_check_branch
      %29 = sbr.rel (0) target = $region9
    $region8: #{tpu_custom_call.1} parent=1 // pred_region
      %s31 = ssub.s32 3200, 3200
      %32 = vsyncadd [#allocation6], %s31
      %s33 = sshll.u32 [#allocation5], 4
      %s34 = int_to_ptr.vmem [resolvable:$true] %s33
      %39 = dma.hbm_to_vmem [thread:$0]  %s1, 3200, %s34, [#allocation6], 128, 128, 8
    $region9: #{tpu_custom_call.1} parent=1 // pred_fallthru
      _
    // Predicated region
    $region10: #{tpu_custom_call.1} parent=1 // pred_check
      _
    $region11: #{tpu_custom_call.1} parent=1 // pred_check_branch
      %41 = sbr.rel (0) target = $region13
    $region12: #{tpu_custom_call.1} parent=1 // pred_region
      %s43 = ssub.s32 2048, 2048
      %44 = vsyncadd [#allocation6], %s43
      %s45 = sshll.u32 [#allocation7], 4
      %s46 = int_to_ptr.vmem [resolvable:$true] %s45
      %51 = dma.hbm_to_vmem [thread:$0]  %s2, 2048, %s46, [#allocation6], 128, 128, 8
    $region13: #{tpu_custom_call.1} parent=1 // pred_fallthru
      _
    // Predicated region
    $region14: #{tpu_custom_call.1} parent=1 // pred_check
      _
    $region15: #{tpu_custom_call.1} parent=1 // pred_check_branch
      %53 = sbr.rel (0) target = $region17
    $region16: #{tpu_custom_call.1} parent=1 // pred_region
      %s55 = ssub.s32 2048, 2048
      %56 = vsyncadd [#allocation9], %s55
      %s57 = sshll.u32 [#allocation8], 4
      %s58 = int_to_ptr.vmem [resolvable:$true] %s57
      %63 = dma.hbm_to_vmem [thread:$0]  %s3, 2048, %s58, [#allocation9], 128, 128, 8
    $region17: #{tpu_custom_call.1} parent=1 // pred_fallthru
      _
    // Predicated region
    $region18: #{tpu_custom_call.1} parent=1 // pred_check
      _
    $region19: #{tpu_custom_call.1} parent=1 // pred_check_branch
      %65 = sbr.rel (0) target = $region21
    $region20: #{tpu_custom_call.1} parent=1 // pred_region
      _
    $region21: #{tpu_custom_call.1} parent=1 // pred_fallthru
      _
    // Predicated region
    $region22: #{tpu_custom_call.1} parent=1 // pred_check
      _
    $region23: #{tpu_custom_call.1} parent=1 // pred_check_branch
      %67 = sbr.rel (0) target = $region25
    $region24: #{tpu_custom_call.1} parent=1 // pred_region
      %68 = dma.done [#allocation3], 512
    $region25: #{tpu_custom_call.1} parent=1 // pred_fallthru
      _
    // Predicated region
    $region26: #{tpu_custom_call.1} parent=1 // pred_check
      _
    $region27: #{tpu_custom_call.1} parent=1 // pred_check_branch
      %70 = sbr.rel (0) target = $region29
    $region28: #{tpu_custom_call.1} parent=1 // pred_region
      %71 = dma.done [#allocation6], 3200
    $region29: #{tpu_custom_call.1} parent=1 // pred_fallthru
      _
    // Predicated region
    $region30: #{tpu_custom_call.1} parent=1 // pred_check
      _
    $region31: #{tpu_custom_call.1} parent=1 // pred_check_branch
      %73 = sbr.rel (0) target = $region33
    $region32: #{tpu_custom_call.1} parent=1 // pred_region
      %74 = dma.done [#allocation6], 2048
    $region33: #{tpu_custom_call.1} parent=1 // pred_fallthru
      _
    // Predicated region
    $region34: #{tpu_custom_call.1} parent=1 // pred_check
      _
    $region35: #{tpu_custom_call.1} parent=1 // pred_check_branch
      %76 = sbr.rel (0) target = $region37
    $region36: #{tpu_custom_call.1} parent=1 // pred_region
      %77 = dma.done [#allocation9], 2048
    $region37: #{tpu_custom_call.1} parent=1 // pred_fallthru
      _
    %v78 = vld [vmem:[%s4] sm:$0x1]
    %v79 = vld [vmem:[%s4 + $0x1] sm:$0x1]
    %v80 = vld [vmem:[%s4 + $0x2] sm:$0x1]
    %v81 = vld [vmem:[#allocation2] sm:$0xff]
    %v82 = vld [vmem:[#allocation2 + $0x8] sm:$0xff]
    %v83 = vld [vmem:[#allocation2 + $0x10] sm:$0xff]
    %v84 = vld [vmem:[#allocation2 + $0x18] sm:$0xff]
    %v85 = vld [vmem:[#allocation5] sm:$0xff]
    %v86 = vld [vmem:[#allocation5 + $0x8] sm:$0xff]
    %v87 = vld [vmem:[#allocation5 + $0x10] sm:$0xff]
    %v88 = vld [vmem:[#allocation5 + $0x18] sm:$0xff]
    %v89 = vld [vmem:[#allocation5 + $0x20] sm:$0xff]
    %v90 = vld [vmem:[#allocation5 + $0x28] sm:$0xff]
    %v91 = vld [vmem:[#allocation5 + $0x30] sm:$0xff]
    %v92 = vld [vmem:[#allocation5 + $0x38] sm:$0xff]
    %v93 = vld [vmem:[#allocation5 + $0x40] sm:$0xff]
    %v94 = vld [vmem:[#allocation5 + $0x48] sm:$0xff]
    %v95 = vld [vmem:[#allocation5 + $0x50] sm:$0xff]
    %v96 = vld [vmem:[#allocation5 + $0x58] sm:$0xff]
    %v97 = vld [vmem:[#allocation5 + $0x60] sm:$0xff]
    %v98 = vld [vmem:[#allocation5 + $0x68] sm:$0xff]
    %v99 = vld [vmem:[#allocation5 + $0x70] sm:$0xff]
    %v100 = vld [vmem:[#allocation5 + $0x78] sm:$0xff]
    %v101 = vld [vmem:[#allocation5 + $0x80] sm:$0xff]
    %v102 = vld [vmem:[#allocation5 + $0x88] sm:$0xff]
    %v103 = vld [vmem:[#allocation5 + $0x90] sm:$0xff]
    %v104 = vld [vmem:[#allocation5 + $0x98] sm:$0xff]
    %v105 = vld [vmem:[#allocation5 + $0xa0] sm:$0xff]
    %v106 = vld [vmem:[#allocation5 + $0xa8] sm:$0xff]
    %v107 = vld [vmem:[#allocation5 + $0xb0] sm:$0xff]
    %v108 = vld [vmem:[#allocation5 + $0xb8] sm:$0xff]
    %v109 = vld [vmem:[#allocation5 + $0xc0] sm:$0xf]
    %v110 = vlaneseq
    %v111 = vshrl.u32 %v110, 7
    %v112 = vsub.s32 0, %v111
    %v113 = vrot.slane %v78, %v112
    %vm114 = vcmask 556032
    %v116 = vsel %vm114, %v82, 0
    %v119 = vsel %vm114, %v84, 0
    %vm121 = vcmask 1043456
    %v123 = vsel %vm121, %v109, 0
    %125 = vmatprep.subr.mxu0 0.0
    %126 = vmatpush1.msra.mxu0 %v85
    %127 = vmatprep.subr.mxu0 0.0
    %128 = vmatpush1.msra.mxu0 %v86
    %129 = vmatprep.subr.mxu0 0.0
    %130 = vmatpush1.msra.mxu0 %v87
    %131 = vmatprep.subr.mxu0 0.0
    %132 = vmatpush1.msra.mxu0 %v88
    %133 = vmatprep.subr.mxu0 0.0
    %134 = vmatpush1.msra.mxu0 %v89
    %135 = vmatprep.subr.mxu0 0.0
    %136 = vmatpush1.msra.mxu0 %v90
    %137 = vmatprep.subr.mxu0 0.0
    %138 = vmatpush1.msra.mxu0 %v91
    %139 = vmatprep.subr.mxu0 0.0
    %140 = vmatpush1.msra.mxu0 %v92
    %141 = vmatprep.subr.mxu0 0.0
    %142 = vmatpush1.msra.mxu0 %v93
    %143 = vmatprep.subr.mxu0 0.0
    %144 = vmatpush1.msra.mxu0 %v94
    %145 = vmatprep.subr.mxu0 0.0
    %146 = vmatpush1.msra.mxu0 %v95
    %147 = vmatprep.subr.mxu0 0.0
    %148 = vmatpush1.msra.mxu0 %v96
    %149 = vmatprep.subr.mxu0 0.0
    %150 = vmatpush1.msra.mxu0 %v97
    %151 = vmatprep.subr.mxu0 0.0
    %152 = vmatpush1.msra.mxu0 %v98
    %153 = vmatprep.subr.mxu0 0.0
    %154 = vmatpush1.msra.mxu0 %v99
    %155 = vmatprep.subr.mxu0 0.0
    %156 = vmatpush1.msra.mxu0 %v100
    %157 = vmatprep.subr.mxu0 0.0
    %158 = vmatpush1.msra.mxu0 %v101
    %159 = vmatprep.subr.mxu0 0.0
    %160 = vmatpush1.msra.mxu0 %v102
    %161 = vmatprep.subr.mxu0 0.0
    %162 = vmatpush1.msra.mxu0 %v103
    %163 = vmatprep.subr.mxu0 0.0
    %164 = vmatpush1.msra.mxu0 %v104
    %165 = vmatprep.subr.mxu0 0.0
    %166 = vmatpush1.msra.mxu0 %v105
    %167 = vmatprep.subr.mxu0 0.0
    %168 = vmatpush1.msra.mxu0 %v106
    %169 = vmatprep.subr.mxu0 0.0
    %170 = vmatpush1.msra.mxu0 %v107
    %171 = vmatprep.subr.mxu0 0.0
    %172 = vmatpush1.msra.mxu0 %v108
    %173 = vmatprep.subr.mxu0 0.0
    %174 = vmatpush1.msra.mxu0 %v123
    %175 = vmatprep.subr.mxu0 0.0
    %176 = vmatpush1.msra.mxu0 0.0
    %177 = vmatprep.subr.mxu0 0.0
    %178 = vmatpush1.msra.mxu0 0.0
    %179 = vmatprep.subr.mxu0 0.0
    %180 = vmatpush1.msra.mxu0 0.0
    %181 = vmatprep.subr.mxu0 0.0
    %182 = vmatpush1.msra.mxu0 0.0
    %183 = vmatprep.subr.mxu0 0.0
    %184 = vmatpush1.msra.mxu0 0.0
    %185 = vmatprep.subr.mxu0 0.0
    %186 = vmatpush1.msra.mxu0 0.0
    %187 = vmatprep.subr.mxu0 0.0
    %188 = vmatpush1.msra.mxu0 0.0
    %189 = vmatprep.mubr.f32.mxu0 %v116
    %190 = vmatmul.mubr.f32.gmra.mrb[0].mxu0 %v81
    %v191 = vpop.f32.mrb[0].mxu0
    %v192 = vadd.f32 %v113, %v191
    %v193 = vpop.f32.mrb[0].mxu0
    %194 = vmatprep.mubr.f32.mxu0 %v119
    %195 = vmatmul.mubr.f32.gmra.mrb[0].mxu0 %v83
    %v196 = vpop.f32.mrb[0].mxu0
    %v197 = vadd.f32 %v113, %v196
    %v198 = vpop.f32.mrb[0].mxu0
    %199 = vdwg.mxu0
    %v200 = vmax.f32 %v192, 0.0
    %v201 = vmax.f32 %v197, 0.0
    %v202 = vld [vmem:[#allocation7] sm:$0xff]
    %v203 = vld [vmem:[#allocation7 + $0x8] sm:$0xff]
    %v204 = vld [vmem:[#allocation7 + $0x10] sm:$0xff]
    %v205 = vld [vmem:[#allocation7 + $0x18] sm:$0xff]
    %v206 = vld [vmem:[#allocation7 + $0x20] sm:$0xff]
    %v207 = vld [vmem:[#allocation7 + $0x28] sm:$0xff]
    %v208 = vld [vmem:[#allocation7 + $0x30] sm:$0xff]
    %v209 = vld [vmem:[#allocation7 + $0x38] sm:$0xff]
    %v210 = vld [vmem:[#allocation7 + $0x40] sm:$0xff]
    %v211 = vld [vmem:[#allocation7 + $0x48] sm:$0xff]
    %v212 = vld [vmem:[#allocation7 + $0x50] sm:$0xff]
    %v213 = vld [vmem:[#allocation7 + $0x58] sm:$0xff]
    %v214 = vld [vmem:[#allocation7 + $0x60] sm:$0xff]
    %v215 = vld [vmem:[#allocation7 + $0x68] sm:$0xff]
    %v216 = vld [vmem:[#allocation7 + $0x70] sm:$0xff]
    %v217 = vld [vmem:[#allocation7 + $0x78] sm:$0xff]
    %v218 = vlaneseq
    %v219 = vshrl.u32 %v218, 7
    %v220 = vsub.s32 0, %v219
    %v221 = vrot.slane %v79, %v220
    %222 = vmatprep.subr.mxu0 0.0
    %223 = vmatpush1.msra.mxu0 %v202
    %224 = vmatprep.subr.mxu0 0.0
    %225 = vmatpush1.msra.mxu0 %v203
    %226 = vmatprep.subr.mxu0 0.0
    %227 = vmatpush1.msra.mxu0 %v204
    %228 = vmatprep.subr.mxu0 0.0
    %229 = vmatpush1.msra.mxu0 %v205
    %230 = vmatprep.subr.mxu0 0.0
    %231 = vmatpush1.msra.mxu0 %v206
    %232 = vmatprep.subr.mxu0 0.0
    %233 = vmatpush1.msra.mxu0 %v207
    %234 = vmatprep.subr.mxu0 0.0
    %235 = vmatpush1.msra.mxu0 %v208
    %236 = vmatprep.subr.mxu0 0.0
    %237 = vmatpush1.msra.mxu0 %v209
    %238 = vmatprep.subr.mxu0 0.0
    %239 = vmatpush1.msra.mxu0 %v210
    %240 = vmatprep.subr.mxu0 0.0
    %241 = vmatpush1.msra.mxu0 %v211
    %242 = vmatprep.subr.mxu0 0.0
    %243 = vmatpush1.msra.mxu0 %v212
    %244 = vmatprep.subr.mxu0 0.0
    %245 = vmatpush1.msra.mxu0 %v213
    %246 = vmatprep.subr.mxu0 0.0
    %247 = vmatpush1.msra.mxu0 %v214
    %248 = vmatprep.subr.mxu0 0.0
    %249 = vmatpush1.msra.mxu0 %v215
    %250 = vmatprep.subr.mxu0 0.0
    %251 = vmatpush1.msra.mxu0 %v216
    %252 = vmatprep.subr.mxu0 0.0
    %253 = vmatpush1.msra.mxu0 %v217
    %254 = vmatprep.subr.mxu0 0.0
    %255 = vmatpush1.msra.mxu0 0.0
    %256 = vmatprep.subr.mxu0 0.0
    %257 = vmatpush1.msra.mxu0 0.0
    %258 = vmatprep.subr.mxu0 0.0
    %259 = vmatpush1.msra.mxu0 0.0
    %260 = vmatprep.subr.mxu0 0.0
    %261 = vmatpush1.msra.mxu0 0.0
    %262 = vmatprep.subr.mxu0 0.0
    %263 = vmatpush1.msra.mxu0 0.0
    %264 = vmatprep.subr.mxu0 0.0
    %265 = vmatpush1.msra.mxu0 0.0
    %266 = vmatprep.subr.mxu0 0.0
    %267 = vmatpush1.msra.mxu0 0.0
    %268 = vmatprep.subr.mxu0 0.0
    %269 = vmatpush1.msra.mxu0 0.0
    %270 = vmatprep.subr.mxu0 0.0
    %271 = vmatpush1.msra.mxu0 0.0
    %272 = vmatprep.subr.mxu0 0.0
    %273 = vmatpush1.msra.mxu0 0.0
    %274 = vmatprep.subr.mxu0 0.0
    %275 = vmatpush1.msra.mxu0 0.0
    %276 = vmatprep.subr.mxu0 0.0
    %277 = vmatpush1.msra.mxu0 0.0
    %278 = vmatprep.subr.mxu0 0.0
    %279 = vmatpush1.msra.mxu0 0.0
    %280 = vmatprep.subr.mxu0 0.0
    %281 = vmatpush1.msra.mxu0 0.0
    %282 = vmatprep.subr.mxu0 0.0
    %283 = vmatpush1.msra.mxu0 0.0
    %284 = vmatprep.subr.mxu0 0.0
    %285 = vmatpush1.msra.mxu0 0.0
    %286 = vmatprep.mubr.f32.mxu0 0.0
    %287 = vmatmul.mubr.f32.gmra.mrb[0].mxu0 %v200
    %v288 = vpop.f32.mrb[0].mxu0
    %v289 = vadd.f32 %v221, %v288
    %v290 = vpop.f32.mrb[0].mxu0
    %291 = vmatprep.mubr.f32.mxu0 0.0
    %292 = vmatmul.mubr.f32.gmra.mrb[0].mxu0 %v201
    %v293 = vpop.f32.mrb[0].mxu0
    %v294 = vadd.f32 %v221, %v293
    %v295 = vpop.f32.mrb[0].mxu0
    %296 = vdwg.mxu0
    %v297 = vmax.f32 %v289, 0.0
    %v298 = vmax.f32 %v294, 0.0
    %v299 = vld [vmem:[#allocation8] sm:$0xff]
    %v300 = vld [vmem:[#allocation8 + $0x8] sm:$0xff]
    %v301 = vld [vmem:[#allocation8 + $0x10] sm:$0xff]
    %v302 = vld [vmem:[#allocation8 + $0x18] sm:$0xff]
    %v303 = vld [vmem:[#allocation8 + $0x20] sm:$0xff]
    %v304 = vld [vmem:[#allocation8 + $0x28] sm:$0xff]
    %v305 = vld [vmem:[#allocation8 + $0x30] sm:$0xff]
    %v306 = vld [vmem:[#allocation8 + $0x38] sm:$0xff]
    %v307 = vld [vmem:[#allocation8 + $0x40] sm:$0xff]
    %v308 = vld [vmem:[#allocation8 + $0x48] sm:$0xff]
    %v309 = vld [vmem:[#allocation8 + $0x50] sm:$0xff]
    %v310 = vld [vmem:[#allocation8 + $0x58] sm:$0xff]
    %v311 = vld [vmem:[#allocation8 + $0x60] sm:$0xff]
    %v312 = vld [vmem:[#allocation8 + $0x68] sm:$0xff]
    %v313 = vld [vmem:[#allocation8 + $0x70] sm:$0xff]
    %v314 = vld [vmem:[#allocation8 + $0x78] sm:$0xff]
    %v315 = vlaneseq
    %v316 = vshrl.u32 %v315, 7
    %v317 = vsub.s32 0, %v316
    %v318 = vrot.slane %v80, %v317
    %319 = vmatprep.subr.mxu0 0.0
    %320 = vmatpush1.msra.mxu0 %v299
    %321 = vmatprep.subr.mxu0 0.0
    %322 = vmatpush1.msra.mxu0 %v300
    %323 = vmatprep.subr.mxu0 0.0
    %324 = vmatpush1.msra.mxu0 %v301
    %325 = vmatprep.subr.mxu0 0.0
    %326 = vmatpush1.msra.mxu0 %v302
    %327 = vmatprep.subr.mxu0 0.0
    %328 = vmatpush1.msra.mxu0 %v303
    %329 = vmatprep.subr.mxu0 0.0
    %330 = vmatpush1.msra.mxu0 %v304
    %331 = vmatprep.subr.mxu0 0.0
    %332 = vmatpush1.msra.mxu0 %v305
    %333 = vmatprep.subr.mxu0 0.0
    %334 = vmatpush1.msra.mxu0 %v306
    %335 = vmatprep.subr.mxu0 0.0
    %336 = vmatpush1.msra.mxu0 %v307
    %337 = vmatprep.subr.mxu0 0.0
    %338 = vmatpush1.msra.mxu0 %v308
    %339 = vmatprep.subr.mxu0 0.0
    %340 = vmatpush1.msra.mxu0 %v309
    %341 = vmatprep.subr.mxu0 0.0
    %342 = vmatpush1.msra.mxu0 %v310
    %343 = vmatprep.subr.mxu0 0.0
    %344 = vmatpush1.msra.mxu0 %v311
    %345 = vmatprep.subr.mxu0 0.0
    %346 = vmatpush1.msra.mxu0 %v312
    %347 = vmatprep.subr.mxu0 0.0
    %348 = vmatpush1.msra.mxu0 %v313
    %349 = vmatprep.subr.mxu0 0.0
    %350 = vmatpush1.msra.mxu0 %v314
    %351 = vmatprep.subr.mxu0 0.0
    %352 = vmatpush1.msra.mxu0 0.0
    %353 = vmatprep.subr.mxu0 0.0
    %354 = vmatpush1.msra.mxu0 0.0
    %355 = vmatprep.subr.mxu0 0.0
    %356 = vmatpush1.msra.mxu0 0.0
    %357 = vmatprep.subr.mxu0 0.0
    %358 = vmatpush1.msra.mxu0 0.0
    %359 = vmatprep.subr.mxu0 0.0
    %360 = vmatpush1.msra.mxu0 0.0
    %361 = vmatprep.subr.mxu0 0.0
    %362 = vmatpush1.msra.mxu0 0.0
    %363 = vmatprep.subr.mxu0 0.0
    %364 = vmatpush1.msra.mxu0 0.0
    %365 = vmatprep.subr.mxu0 0.0
    %366 = vmatpush1.msra.mxu0 0.0
    %367 = vmatprep.subr.mxu0 0.0
    %368 = vmatpush1.msra.mxu0 0.0
    %369 = vmatprep.subr.mxu0 0.0
    %370 = vmatpush1.msra.mxu0 0.0
    %371 = vmatprep.subr.mxu0 0.0
    %372 = vmatpush1.msra.mxu0 0.0
    %373 = vmatprep.subr.mxu0 0.0
    %374 = vmatpush1.msra.mxu0 0.0
    %375 = vmatprep.subr.mxu0 0.0
    %376 = vmatpush1.msra.mxu0 0.0
    %377 = vmatprep.subr.mxu0 0.0
    %378 = vmatpush1.msra.mxu0 0.0
    %379 = vmatprep.subr.mxu0 0.0
    %380 = vmatpush1.msra.mxu0 0.0
    %381 = vmatprep.subr.mxu0 0.0
    %382 = vmatpush1.msra.mxu0 0.0
    %383 = vmatprep.mubr.f32.mxu0 0.0
    %384 = vmatmul.mubr.f32.gmra.mrb[0].mxu0 %v297
    %v385 = vpop.f32.mrb[0].mxu0
    %v386 = vadd.f32 %v318, %v385
    %v387 = vpop.f32.mrb[0].mxu0
    %388 = vmatprep.mubr.f32.mxu0 0.0
    %389 = vmatmul.mubr.f32.gmra.mrb[0].mxu0 %v298
    %v390 = vpop.f32.mrb[0].mxu0
    %v391 = vadd.f32 %v318, %v390
    %v392 = vpop.f32.mrb[0].mxu0
    %393 = vdwg.mxu0
    %394 = vst [vmem:[#allocation10] sm:$0xff] %v386
    %395 = vst [vmem:[#allocation10 + $0x8] sm:$0xff] %v391
    %397 = vrot.lane.b32.xlu0 %v391, 127
    %v398 = vpop.permute.xlu0 %397
    %v400 = vadd.f32 %v386, %v398
    %v401 = vsub.f32 0.0, %v400
    %v402 = vmul.f32 %v401, 1.442695
    %v403 = vpow.pop %v402
    %v404 = vadd.f32 %v403, 1.0
    %v405 = vrcp.pop %v404
    %v406 = vmul.f32 1.0, %v405
    %408 = vrot.lane.b32.xlu0 %v406, 118
    %v409 = vpop.permute.xlu0 %408
    %vm411 = vcmask 7168
    %412 = vst.msk [vmem:[%s6] sm:$0xff] %vm411, %v409
    // Predicated region
    $region38: #{tpu_custom_call.1} parent=1 // pred_check
      _
    $region39: #{tpu_custom_call.1} parent=1 // pred_check_branch
      %414 = sbr.rel (0) target = $region41
    $region40: #{tpu_custom_call.1} parent=1 // pred_region
      %s416 = ssub.s32 256, 256
      %417 = vsyncadd [#allocation4], %s416
      %s418 = sshll.u32 [#allocation10], 4
      %s419 = int_to_ptr.vmem [resolvable:$true] %s418
      %424 = dma.vmem_to_hbm [thread:$0]  %s419, 256, %s5, [#allocation4], 128, 128, 8
    $region41: #{tpu_custom_call.1} parent=1 // pred_fallthru
      _
    // Predicated region
    $region42: #{tpu_custom_call.1} parent=1 // pred_check
      _
    $region43: #{tpu_custom_call.1} parent=1 // pred_check_branch
      %426 = sbr.rel (0) target = $region45
    $region44: #{tpu_custom_call.1} parent=1 // pred_region
      _
    $region45: #{tpu_custom_call.1} parent=1 // pred_fallthru
      _
    // Predicated region
    $region46: #{tpu_custom_call.1} parent=1 // pred_check
      _
    $region47: #{tpu_custom_call.1} parent=1 // pred_check_branch
      %428 = sbr.rel (0) target = $region49
    $region48: #{tpu_custom_call.1} parent=1 // pred_region
      %429 = dma.done [#allocation4], 256
    $region49: #{tpu_custom_call.1} parent=1 // pred_fallthru
      _
    // Predicated region
    $region50: #{tpu_custom_call.1} parent=1 // pred_check
      _
    $region51: #{tpu_custom_call.1} parent=1 // pred_check_branch
      %431 = sbr.rel (0) target = $region53
    $region52: #{tpu_custom_call.1} parent=1 // pred_region
      _
    $region53: #{tpu_custom_call.1} parent=1 // pred_fallthru
      _
    %432 = vsyncpa [#allocation3], 1
    %433 = vsyncpa [#allocation6], 1
    %434 = vsyncpa [#allocation9], 1
    %435 = vsyncpa [#allocation4], 1

</llo_original>
